<compile_context>
chip_gen: v7x
topology: tpu7x:2x2x1
jax: 0.10.0
libtpu: 0.0.40
codegen_flags: <defaults>
</compile_context>

<pallas_src>
import functools
import numpy as np

import jax
import jax.numpy as jnp
from jax import lax
from jax.experimental import pallas as pl
from jax.experimental.pallas import tpu as pltpu

BN_EPS = 1e-5
GN_EPS = 1e-5


def _round_up(x, m):
    return (x + m - 1) // m * m


# ----------------------------------------------------------------------------
# Fused matmul (+ optional bias) + optional ReLU  (1x1 convs, classifier head)
# ----------------------------------------------------------------------------
def _matmul_kernel(x_ref, w_ref, o_ref, *, relu):
    y = jnp.dot(x_ref[...], w_ref[...], preferred_element_type=jnp.float32)
    if relu:
        y = jnp.maximum(y, 0.0)
    o_ref[...] = y.astype(o_ref.dtype)


def _matmul_bias_kernel(x_ref, w_ref, b_ref, o_ref, *, relu):
    y = jnp.dot(x_ref[...], w_ref[...], preferred_element_type=jnp.float32)
    y = y + b_ref[...]
    if relu:
        y = jnp.maximum(y, 0.0)
    o_ref[...] = y.astype(o_ref.dtype)


def matmul_bias(x, w, bias=None, relu=False, out_dtype=jnp.bfloat16):
    """y = [relu]((x @ w) [+ bias]).  bf16 MXU inputs, f32 accumulate."""
    M, K = x.shape
    K2, N = w.shape
    assert K == K2

    Np = _round_up(N, 128)
    wp = w if Np == N else jnp.pad(w, ((0, 0), (0, Np - N)))

    TM = min(512 if K >= 512 else 256, _round_up(M, 128))
    Mp = _round_up(M, TM)
    xp = x if Mp == M else jnp.pad(x, ((0, Mp - M), (0, 0)))
    TN = 256 if Np % 256 == 0 else 128
    grid = (Mp // TM, Np // TN)

    x_spec = pl.BlockSpec((TM, K), lambda i, j: (i, 0))
    w_spec = pl.BlockSpec((K, TN), lambda i, j: (0, j))
    o_spec = pl.BlockSpec((TM, TN), lambda i, j: (i, j))

    if bias is None:
        kernel = functools.partial(_matmul_kernel, relu=relu)
        in_specs = [x_spec, w_spec]
        operands = (xp.astype(jnp.bfloat16), wp.astype(jnp.bfloat16))
    else:
        b2 = jnp.pad(bias.astype(jnp.float32).reshape(1, N),
                     ((0, 0), (0, Np - N)))
        kernel = functools.partial(_matmul_bias_kernel, relu=relu)
        in_specs = [x_spec, w_spec, pl.BlockSpec((1, TN), lambda i, j: (0, j))]
        operands = (xp.astype(jnp.bfloat16), wp.astype(jnp.bfloat16), b2)

    out = pl.pallas_call(
        kernel,
        out_shape=jax.ShapeDtypeStruct((Mp, Np), out_dtype),
        grid_spec=pltpu.PrefetchScalarGridSpec(
            num_scalar_prefetch=0, grid=grid,
            in_specs=in_specs, out_specs=o_spec),
        compiler_params=pltpu.CompilerParams(
            dimension_semantics=("parallel", "parallel")),
    )(*operands)
    return out[:M, :N]


def conv1x1_affine(x_nhwc, w, scale=None, bias=None, relu=False,
                   out_dtype=jnp.bfloat16):
    """1x1 conv + (folded BN scale) + optional bias + optional ReLU."""
    B, H, W, C = x_nhwc.shape
    Cout = w.shape[0]
    wm = w[:, :, 0, 0].T  # (Cin, Cout)
    if scale is not None:
        wm = wm * scale[None, :]
    y = matmul_bias(x_nhwc.reshape(B * H * W, C), wm, bias, relu, out_dtype)
    return y.reshape(B, H, W, Cout)


# ----------------------------------------------------------------------------
# 3x3 (dilated) conv: batch-tiled, whole-image blocks, 9 taps accumulated in
# f32.  Each tap LHS is a (TB*H*W, Cin) patch assembled in VMEM -> large MXU M.
# ----------------------------------------------------------------------------
def _conv3x3_kernel(x_ref, w_ref, o_ref, *, tb, h, w, c, d, relu):
    rows = tb * h * w
    npad = w_ref.shape[-1]
    acc = jnp.zeros((rows, npad), jnp.float32)
    for kh in range(3):
        for kw in range(3):
            tap = x_ref[:, kh * d:kh * d + h, kw * d:kw * d + w, :]
            acc = acc + jnp.dot(tap.reshape(rows, c), w_ref[kh * 3 + kw],
                                preferred_element_type=jnp.float32)
    if relu:
        acc = jnp.maximum(acc, 0.0)
    o_ref[...] = acc.reshape(tb, h, w, npad).astype(o_ref.dtype)


def conv3x3_affine(x_nhwc, w, dilation, scale=None, relu=False,
                   out_dtype=jnp.bfloat16):
    """3x3 conv (padding=dilation, no bias) + folded BN scale + optional ReLU."""
    B, H, W, C = x_nhwc.shape
    Cout = w.shape[0]
    Np = _round_up(Cout, 128)                  # lane-dense output stores

    wm = jnp.transpose(w, (2, 3, 1, 0)).reshape(9, C, Cout)  # (tap, cin, cout)
    if scale is not None:
        wm = wm * scale[None, None, :]
    if Np != Cout:
        wm = jnp.pad(wm, ((0, 0), (0, 0), (0, Np - Cout)))

    d = dilation
    xp = jnp.pad(x_nhwc.astype(jnp.bfloat16), ((0, 0), (d, d), (d, d), (0, 0)))
    Hp, Wp = H + 2 * d, W + 2 * d

    # batch tile: largest divisor of B keeping <= 512 output rows per MXU call
    TB = 1
    for t in range(1, B + 1):
        if B % t == 0 and t * H * W <= 512:
            TB = t
    grid = (B // TB,)

    out = pl.pallas_call(
        functools.partial(_conv3x3_kernel, tb=TB, h=H, w=W, c=C, d=d,
                          relu=relu),
        out_shape=jax.ShapeDtypeStruct((B, H, W, Np), out_dtype),
        grid_spec=pltpu.PrefetchScalarGridSpec(
            num_scalar_prefetch=0,
            grid=grid,
            in_specs=[
                pl.BlockSpec((TB, Hp, Wp, C), lambda i: (i, 0, 0, 0)),
                # TODO(synk): pipeline_mode=pl.Buffered(1) for this constant
                # weight block once stable; default double-buffers ~2x its size.
                pl.BlockSpec((9, C, Np), lambda i: (0, 0, 0)),
            ],
            out_specs=pl.BlockSpec((TB, H, W, Np), lambda i: (i, 0, 0, 0)),
        ),
        compiler_params=pltpu.CompilerParams(
            dimension_semantics=("parallel",)),
    )(xp, wm.astype(jnp.bfloat16))
    return out[..., :Cout]


# ----------------------------------------------------------------------------
# Global average pool: (B, HW-tiles) grid, parallel batch axis, f32 accumulator
# ----------------------------------------------------------------------------
def _gap_kernel(x_ref, o_ref, acc_ref, *, inv_n):
    @pl.when(pl.program_id(1) == 0)
    def _():
        acc_ref[...] = jnp.zeros_like(acc_ref)

    acc_ref[...] += jnp.sum(x_ref[...].astype(jnp.float32), axis=1,
                            keepdims=True)

    @pl.when(pl.program_id(1) == pl.num_programs(1) - 1)
    def _():
        o_ref[...] = acc_ref[...] * inv_n


def global_avg_pool(x_nhwc):
    """AdaptiveAvgPool2d(1): (B,H,W,C) -> (B,1,1,C) (f32 output, tiny)."""
    B, H, W, C = x_nhwc.shape
    HW = H * W
    T = min(1024, _round_up(HW, 8))
    HWp = _round_up(HW, T)
    xf = x_nhwc.reshape(B, HW, C)
    if HWp != HW:
        xf = jnp.pad(xf, ((0, 0), (0, HWp - HW), (0, 0)))  # zeros keep the sum
    out = pl.pallas_call(
        functools.partial(_gap_kernel, inv_n=1.0 / HW),
        out_shape=jax.ShapeDtypeStruct((B, 1, C), jnp.float32),
        grid_spec=pltpu.PrefetchScalarGridSpec(
            num_scalar_prefetch=0,
            grid=(B, HWp // T),
            in_specs=[pl.BlockSpec((1, T, C), lambda b, i: (b, i, 0))],
            out_specs=pl.BlockSpec((1, 1, C), lambda b, i: (b, 0, 0)),
            scratch_shapes=[pltpu.VMEM((1, 1, C), jnp.float32)],
        ),
        compiler_params=pltpu.CompilerParams(
            dimension_semantics=("parallel", "arbitrary")),
    )(xf)
    return out.reshape(B, 1, 1, C)


# ----------------------------------------------------------------------------
# ASPP projection without materializing the 1280-channel concat:
#   y = relu( sum_i branch_i @ Wi  +  pooled_bias[b] )      (BN scale folded)
# ----------------------------------------------------------------------------
def _aspp_proj_kernel(x0_ref, x1_ref, x2_ref, x3_ref, pb_ref, w_ref, o_ref, *,
                      tb, h, w):
    rows = tb * h * w
    n = w_ref.shape[-1]
    c = x0_ref.shape[-1]
    acc = jnp.zeros((rows, n), jnp.float32)
    for i, xr in enumerate((x0_ref, x1_ref, x2_ref, x3_ref)):
        acc = acc + jnp.dot(xr[...].reshape(rows, c), w_ref[i],
                            preferred_element_type=jnp.float32)
    acc = acc.reshape(tb, h * w, n) + pb_ref[...]      # per-image pooled branch
    acc = jnp.maximum(acc, 0.0)
    o_ref[...] = acc.reshape(tb, h, w, n).astype(o_ref.dtype)


def aspp_project(branches, pooled_bias, w_chunks, out_dtype=jnp.bfloat16):
    """branches: 4 x (B,H,W,256);  pooled_bias: (B,256) f32 (already scaled);
    w_chunks: (4, 256, 256) with the projection BN scale folded in."""
    B, H, W, C = branches[0].shape
    N = w_chunks.shape[-1]
    TB = 1
    for t in range(1, B + 1):
        if B % t == 0 and t * H * W <= 1024:
            TB = t
    grid = (B // TB,)
    branch_spec = pl.BlockSpec((TB, H, W, C), lambda i: (i, 0, 0, 0))
    return pl.pallas_call(
        functools.partial(_aspp_proj_kernel, tb=TB, h=H, w=W),
        out_shape=jax.ShapeDtypeStruct((B, H, W, N), out_dtype),
        grid_spec=pltpu.PrefetchScalarGridSpec(
            num_scalar_prefetch=0,
            grid=grid,
            in_specs=[branch_spec, branch_spec, branch_spec, branch_spec,
                      pl.BlockSpec((TB, 1, N), lambda i: (i, 0, 0)),
                      pl.BlockSpec((4, C, N), lambda i: (0, 0, 0))],
            out_specs=pl.BlockSpec((TB, H, W, N), lambda i: (i, 0, 0, 0)),
        ),
        compiler_params=pltpu.CompilerParams(dimension_semantics=("parallel",)),
    )(*[b.astype(jnp.bfloat16) for b in branches],
      pooled_bias.reshape(B, 1, N).astype(jnp.float32),
      w_chunks.astype(jnp.bfloat16))


# ----------------------------------------------------------------------------
# GroupNorm(16) + ReLU (per-group stats via (C,G) membership matmuls, f32 stats)
# ----------------------------------------------------------------------------
def _gn_relu_kernel(x_ref, mg_ref, mgt_ref, gam_ref, bet_ref, o_ref, *,
                    h, w, c, eps, inv_n):
    # NOTE: E[x^2]-E[x]^2 in f32; fine at these magnitudes (see review note).
    x = x_ref[0].astype(jnp.float32).reshape(h * w, c)       # (HW, C)
    s1 = jnp.sum(x, axis=0, keepdims=True)                   # (1, C)
    s2 = jnp.sum(x * x, axis=0, keepdims=True)                # (1, C)
    mean_g = jnp.dot(s1, mg_ref[...], preferred_element_type=jnp.float32) * inv_n
    ex2_g = jnp.dot(s2, mg_ref[...], preferred_element_type=jnp.float32) * inv_n
    var_g = ex2_g - mean_g * mean_g
    rstd_g = lax.rsqrt(var_g + eps)
    mean_c = jnp.dot(mean_g, mgt_ref[...], preferred_element_type=jnp.float32)
    rstd_c = jnp.dot(rstd_g, mgt_ref[...], preferred_element_type=jnp.float32)
    y = (x - mean_c) * rstd_c * gam_ref[...] + bet_ref[...]
    y = jnp.maximum(y, 0.0)
    o_ref[0] = y.reshape(h, w, c).astype(o_ref.dtype)


def group_norm_relu(x_nhwc, gamma, beta, num_groups, eps=GN_EPS,
                    out_dtype=jnp.bfloat16):
    B, H, W, C = x_nhwc.shape
    G = num_groups
    Cg = C // G
    mg = np.zeros((C, G), np.float32)
    for g in range(G):
        mg[g * Cg:(g + 1) * Cg, g] = 1.0
    # TODO(synk): two-pass row-tiled variant for big spatial maps (v7x 64 MiB
    # VMEM); whole-image blocks are fine at these sizes.
    return pl.pallas_call(
        functools.partial(_gn_relu_kernel, h=H, w=W, c=C, eps=eps,
                          inv_n=1.0 / (H * W * Cg)),
        out_shape=jax.ShapeDtypeStruct((B, H, W, C), out_dtype),
        grid_spec=pltpu.PrefetchScalarGridSpec(
            num_scalar_prefetch=0,
            grid=(B,),
            in_specs=[
                pl.BlockSpec((1, H, W, C), lambda b: (b, 0, 0, 0)),
                pl.BlockSpec((C, G), lambda b: (0, 0)),
                pl.BlockSpec((G, C), lambda b: (0, 0)),
                pl.BlockSpec((1, C), lambda b: (0, 0)),
                pl.BlockSpec((1, C), lambda b: (0, 0)),
            ],
            out_specs=pl.BlockSpec((1, H, W, C), lambda b: (b, 0, 0, 0)),
        ),
        compiler_params=pltpu.CompilerParams(dimension_semantics=("parallel",)),
    )(x_nhwc, jnp.asarray(mg), jnp.asarray(mg.T),
      gamma.reshape(1, C).astype(jnp.float32),
      beta.reshape(1, C).astype(jnp.float32))


# ----------------------------------------------------------------------------
# Separable bilinear resize (align_corners=False), batched over images/rows
# ----------------------------------------------------------------------------
def _interp_matrix(out_size, in_size):
    A = np.zeros((out_size, in_size), np.float32)
    if in_size == out_size:
        np.fill_diagonal(A, 1.0)
        return A
    scale = in_size / out_size
    for t in range(out_size):
        src = scale * (t + 0.5) - 0.5
        if src < 0.0:
            src = 0.0
        i0 = min(int(np.floor(src)), in_size - 1)
        i1 = i0 + 1 if i0 < in_size - 1 else i0
        l1 = src - i0
        A[t, i0] += 1.0 - l1
        A[t, i1] += l1
    return A


def _resize_kernel(a_ref, x_ref, o_ref, *, tb):
    a = a_ref[...]
    for b in range(tb):
        o_ref[b] = jnp.dot(a, x_ref[b].astype(jnp.float32),
                           preferred_element_type=jnp.float32).astype(o_ref.dtype)


def _resize_axis(x_nld, A, out_dtype=jnp.bfloat16):
    """x:(N,L,D), A:(OL,L) -> (N,OL,D) resizing the middle axis, TB items/step."""
    N, L, D = x_nld.shape
    OL = A.shape[0]
    TB = min(N, 16)
    Npad = _round_up(N, TB)
    xp = x_nld if Npad == N else jnp.pad(x_nld,
                                         ((0, Npad - N), (0, 0), (0, 0)))
    out = pl.pallas_call(
        functools.partial(_resize_kernel, tb=TB),
        out_shape=jax.ShapeDtypeStruct((Npad, OL, D), out_dtype),
        grid_spec=pltpu.PrefetchScalarGridSpec(
            num_scalar_prefetch=0,
            grid=(Npad // TB,),
            in_specs=[
                pl.BlockSpec((OL, L), lambda n: (0, 0)),
                pl.BlockSpec((TB, L, D), lambda n: (n, 0, 0)),
            ],
            out_specs=pl.BlockSpec((TB, OL, D), lambda n: (n, 0, 0)),
        ),
        compiler_params=pltpu.CompilerParams(dimension_semantics=("parallel",)),
    )(jnp.asarray(A, jnp.float32), xp)
    return out[:N]


def bilinear_resize(x_nhwc, out_h, out_w):
    B, H, W, C = x_nhwc.shape
    x = x_nhwc
    if H != out_h:
        x = _resize_axis(x.reshape(B, H, W * C),
                         _interp_matrix(out_h, H)).reshape(B, out_h, W, C)
    if W != out_w:
        x = _resize_axis(x.reshape(B * out_h, W, C),
                         _interp_matrix(out_w, W)).reshape(B, out_h, out_w, C)
    return x


def bn_scale(c):
    # inference-mode BatchNorm2d with constant init (gamma=1, beta=0, rm=0, rv=1)
    # -> pure channel scale, zero bias (bias stream dropped entirely).
    return jnp.full((c,), 1.0 / np.sqrt(1.0 + BN_EPS), jnp.float32)


# ----------------------------------------------------------------------------
# Parameters (deterministic kaiming-normal init, like _init_weight)
# ----------------------------------------------------------------------------
def init_params(key, in_channels, low_level_channels, num_classes):
    ks = jax.random.split(key, 11)

    def kaiming(k, cout, cin, kh, kw):
        std = (2.0 / (cin * kh * kw)) ** 0.5
        return std * jax.random.normal(k, (cout, cin, kh, kw), jnp.float32)

    p = {}
    p["proj_w"] = kaiming(ks[0], 48, low_level_channels, 1, 1)
    p["aspp0_w"] = kaiming(ks[1], 256, in_channels, 1, 1)
    p["aspp1_w"] = kaiming(ks[2], 256, in_channels, 3, 3)
    p["aspp2_w"] = kaiming(ks[3], 256, in_channels, 3, 3)
    p["aspp3_w"] = kaiming(ks[4], 256, in_channels, 3, 3)
    p["aspp_pool_w"] = kaiming(ks[5], 256, in_channels, 1, 1)
    p["aspp_proj_w"] = kaiming(ks[6], 256, 5 * 256, 1, 1)
    p["bingo_w"] = kaiming(ks[7], 304, 304, 3, 3)
    p["gn_gamma"] = jnp.ones((304,), jnp.float32)
    p["gn_beta"] = jnp.zeros((304,), jnp.float32)
    p["cls1_w"] = kaiming(ks[8], 256, 304, 3, 3)
    p["cls2_w"] = kaiming(ks[9], num_classes, 256, 1, 1)
    p["cls2_b"] = 0.01 * jax.random.normal(ks[10], (num_classes,), jnp.float32)
    return p


# ----------------------------------------------------------------------------
# Forward pass (mirrors bingo_deeplabplus.forward)
# ----------------------------------------------------------------------------
def bingo_deeplabplus_forward(
    params,
    feature,
    *,
    mini_patch_size,
    output_stride,
    aspp_dilate=(12, 24, 36),
    bingo=True,
    my_batchsize=16,
):
    # NCHW -> NHWC at the boundary; intermediates kept bf16
    low = jnp.transpose(feature["low_level"], (0, 2, 3, 1)).astype(jnp.bfloat16)
    out = jnp.transpose(feature["out"], (0, 2, 3, 1)).astype(jnp.bfloat16)
    B, Hout, Wout, Cin = out.shape

    # ---- self.project(low_level): 1x1 conv + BN + ReLU
    s48 = bn_scale(48)
    low_feat = conv1x1_affine(low, params["proj_w"], s48, None, relu=True)

    # ---- ASPP branches
    s256 = bn_scale(256)
    branches = [conv1x1_affine(out, params["aspp0_w"], s256, None, relu=True)]
    for w, d in zip(
        (params["aspp1_w"], params["aspp2_w"], params["aspp3_w"]), aspp_dilate
    ):
        branches.append(conv3x3_affine(out, w, d, s256, relu=True))

    # pooling branch: GAP -> 1x1 conv+BN+ReLU  (kept as a per-image vector)
    pooled = global_avg_pool(out)                                    # (B,1,1,Cin)
    pooled = conv1x1_affine(pooled, params["aspp_pool_w"], s256, None, relu=True)

    # ---- ASPP projection: no 1280-channel concat, no broadcast of the pooled
    # branch -- accumulate 4 K=256 matmuls + per-image rank-1 pooled bias.
    wproj = params["aspp_proj_w"][:, :, 0, 0].T * s256[None, :]      # (1280,256)
    w_sp = wproj[:1024].reshape(4, 256, 256)                         # spatial chunks
    w_pool = wproj[1024:]                                            # pooling chunk
    pb = matmul_bias(pooled.reshape(B, 256), w_pool, None, relu=False,
                     out_dtype=jnp.float32)                          # (B,256)
    aspp_out = aspp_project(branches, pb, w_sp)                      # (B,H,W,256)
    # Dropout(0.1): identity in eval mode.

    # ---- upsample ASPP output to low-level resolution, concat
    aspp_up = bilinear_resize(aspp_out, low_feat.shape[1], low_feat.shape[2])
    x = jnp.concatenate([low_feat, aspp_up], axis=-1)                # (B,f,f,304)

    if bingo:
        f = mini_patch_size // output_stride
        batch = x.shape[0] // my_batchsize
        M = int(my_batchsize ** 0.5)
        # TODO(synk): fold the mini-patch shuffle (and its inverse) into the
        # bingo conv / GN input index_maps (static patch-row arithmetic) to
        # drop these two XLA transpose HBM round trips.
        xb = (
            x.reshape(batch, M, M, f, f, 304)
            .transpose(0, 1, 3, 2, 4, 5)
            .reshape(batch, M * f, M * f, 304)
        )
        # bingo_process: 3x3 conv (no affine) -> GroupNorm(16) -> ReLU
        xb = conv3x3_affine(xb, params["bingo_w"], 1, relu=False)
        xb = group_norm_relu(xb, params["gn_gamma"], params["gn_beta"], 16)
        # split big map back into mini patches
        x = (
            xb.reshape(batch, M, f, M, f, 304)
            .transpose(0, 1, 3, 2, 4, 5)
            .reshape(batch * my_batchsize, f, f, 304)
        )

    # ---- classifier: 3x3 conv+BN+ReLU then 1x1 conv (with bias, f32 out)
    y = conv3x3_affine(x, params["cls1_w"], 1, s256, relu=True)
    y = conv1x1_affine(y, params["cls2_w"], None, params["cls2_b"], relu=False,
                       out_dtype=jnp.float32)

    return jnp.transpose(y, (0, 3, 1, 2))  # back to NCHW


# ----------------------------------------------------------------------------
if __name__ == "__main__":
    key = jax.random.PRNGKey(0)
    kp, kx1, kx2 = jax.random.split(key, 3)

    in_channels = 8
    low_level_channels = 4
    num_classes = 3
    mini_patch_size, output_stride = 16, 4  # fmap_size = 4
    my_batchsize = 16                       # fixed in the module
    fmap = mini_patch_size // output_stride

    # inputs in NCHW (PyTorch convention)
    low_level = jax.random.normal(
        kx1, (my_batchsize, low_level_channels, fmap, fmap), jnp.float32
    )
    out_feat = jax.random.normal(kx2, (my_batchsize, in_channels, 2, 2), jnp.float32)

    params = init_params(kp, in_channels, low_level_channels, num_classes)

    y = bingo_deeplabplus_forward(
        params,
        {"low_level": low_level, "out": out_feat},
        mini_patch_size=mini_patch_size,
        output_stride=output_stride,
        aspp_dilate=(1, 2, 3),
        bingo=True,
    )
    jax.block_until_ready(y)
    assert y.shape == (my_batchsize, num_classes, fmap, fmap), y.shape
    assert bool(jnp.all(jnp.isfinite(y)))
    print("KERNEL_OK")
</pallas_src>

<mosaic_0001>
module attributes {stable_mosaic.version = 11 : i64} {
  func.func @_matmul_kernel(%arg0: i32, %arg1: i32, %arg2: memref<256x4xbf16, #tpu.memory_space<vmem>>, %arg3: memref<4x128xbf16, #tpu.memory_space<vmem>>, %arg4: memref<256x128xbf16, #tpu.memory_space<vmem>>) attributes {dimension_semantics = [#tpu.dimension_semantics<parallel>, #tpu.dimension_semantics<parallel>], iteration_bounds = array<i64: 1, 1>, scalar_prefetch = 0 : i64, scratch_operands = 0 : i64, tpu.core_type = #tpu.core_type<tc>, window_params = [{transform_indices = @transform_0, window_bounds = array<i64: 256, 4>}, {transform_indices = @transform_1, window_bounds = array<i64: 4, 128>}, {transform_indices = @transform_2, window_bounds = array<i64: 256, 128>}]} {
    %c0 = arith.constant 0 : index
    %c0_0 = arith.constant 0 : index
    %0 = vector.load %arg2[%c0, %c0_0] : memref<256x4xbf16, #tpu.memory_space<vmem>>, vector<256x4xbf16>
    %c0_1 = arith.constant 0 : index
    %c0_2 = arith.constant 0 : index
    %1 = vector.load %arg3[%c0_1, %c0_2] : memref<4x128xbf16, #tpu.memory_space<vmem>>, vector<4x128xbf16>
    %cst = arith.constant dense<0.000000e+00> : vector<256x128xf32>
    %2 = tpu.matmul %0, %1, %cst {dimension_numbers = #tpu.dot_dimension_numbers<[1], [0], [0], [1], [0, 0, 1, 1], [], []>} : vector<256x4xbf16>, vector<4x128xbf16>, vector<256x128xf32> -> vector<256x128xf32>
    %cst_3 = arith.constant 0.000000e+00 : f32
    %3 = vector.broadcast %cst_3 : f32 to vector<256x128xf32>
    %4 = arith.maximumf %2, %3 : vector<256x128xf32>
    %5 = arith.truncf %4 : vector<256x128xf32> to vector<256x128xbf16>
    %c0_4 = arith.constant 0 : index
    %c0_5 = arith.constant 0 : index
    %6 = vector.load %arg4[%c0_4, %c0_5] : memref<256x128xbf16, #tpu.memory_space<vmem>>, vector<256x128xbf16>
    tpu.vector_store %arg4[%c0_4, %c0_5], %5 {strides = array<i32>} : memref<256x128xbf16, #tpu.memory_space<vmem>>, vector<256x128xbf16>,
    return
  }
  func.func @transform_0(%arg0: i32, %arg1: i32) -> (i32, i32) {
    %c0_i32 = arith.constant 0 : i32
    %c0_i32_0 = arith.constant 0 : i32
    return %arg0, %c0_i32 : i32, i32
  }
  func.func @transform_1(%arg0: i32, %arg1: i32) -> (i32, i32) {
    %c0_i32 = arith.constant 0 : i32
    %c0_i32_0 = arith.constant 0 : i32
    return %c0_i32, %arg1 : i32, i32
  }
  func.func @transform_2(%arg0: i32, %arg1: i32) -> (i32, i32) {
    %c0_i32 = arith.constant 0 : i32
    return %arg0, %arg1 : i32, i32
  }
}

</mosaic_0001>

<llo_original>
// kernel: tpu_custom_call.1
$region0: #{tpu_custom_call.1}
  #allocation0 [shape = 'u32[]', space=smem, size = 0x4, offset = 0x4, fixed_abs, tag = 'smem constant byte address 0x4 - core index']
  #allocation1 [shape = 'u32[144,128]{1,0:T(1,128)}', space=vmem, size = 0x12000, scoped, tag = 'internal scratch']
  %s0 = inlined_call_operand.vmem [shape: bf16[256,4], index: 0, kind: input, shape index: {}]
  %s1 = inlined_call_operand.vmem [shape: bf16[4,128], index: 1, kind: input, shape index: {}]
  %s2 = inlined_call_operand.hbm [shape: bf16[256,128], index: 2, kind: output, shape index: {}]
  %s3 = sld [smem:[#allocation0]]
  $region18: #{tpu_custom_call.1} parent=0
    _
  %s5 = ssub.s32 1, %s3
  %s6 = scalar_select 0, %s5, %s3
  $region1: #{tpu_custom_call.1} parent=0
    #allocation2 [shape = 'u8[65536]{0}', space=vmem, size = 0x10000, scoped, tag = 'output window, operand 0, single buffered']
    #allocation3 [shape = 's32[1]{0}', space=sflag, size = 0x4, scoped, tag = 'scoped memory for tpu_custom_call.1']
    %7 = vsyncpa [#allocation3], 0
    // Predicated region
    $region2: #{tpu_custom_call.1} parent=1 // pred_check
      _
    $region3: #{tpu_custom_call.1} parent=1 // pred_check_branch
      %9 = sbr.rel (0) target = $region5
    $region4: #{tpu_custom_call.1} parent=1 // pred_region
      _
    $region5: #{tpu_custom_call.1} parent=1 // pred_fallthru
      _
    // Predicated region
    $region6: #{tpu_custom_call.1} parent=1 // pred_check
      _
    $region7: #{tpu_custom_call.1} parent=1 // pred_check_branch
      %11 = sbr.rel (0) target = $region9
    $region8: #{tpu_custom_call.1} parent=1 // pred_region
      _
    $region9: #{tpu_custom_call.1} parent=1 // pred_fallthru
      _
    %v13 = vld [vmem:[%s0] sm:$0xf]
    %v14 = vld [vmem:[%s0 + $0x4] sm:$0xf]
    %v15 = vld [vmem:[%s0 + $0x8] sm:$0xf]
    %v16 = vld [vmem:[%s0 + $0xc] sm:$0xf]
    %v17 = vld [vmem:[%s0 + $0x10] sm:$0xf]
    %v18 = vld [vmem:[%s0 + $0x14] sm:$0xf]
    %v19 = vld [vmem:[%s0 + $0x18] sm:$0xf]
    %v20 = vld [vmem:[%s0 + $0x1c] sm:$0xf]
    %v21 = vld [vmem:[%s0 + $0x20] sm:$0xf]
    %v22 = vld [vmem:[%s0 + $0x24] sm:$0xf]
    %v23 = vld [vmem:[%s0 + $0x28] sm:$0xf]
    %v24 = vld [vmem:[%s0 + $0x2c] sm:$0xf]
    %v25 = vld [vmem:[%s0 + $0x30] sm:$0xf]
    %v26 = vld [vmem:[%s0 + $0x34] sm:$0xf]
    %v27 = vld [vmem:[%s0 + $0x38] sm:$0xf]
    %v28 = vld [vmem:[%s0 + $0x3c] sm:$0xf]
    %v29 = vld [vmem:[%s0 + $0x40] sm:$0xf]
    %v30 = vld [vmem:[%s0 + $0x44] sm:$0xf]
    %v31 = vld [vmem:[%s0 + $0x48] sm:$0xf]
    %v32 = vld [vmem:[%s0 + $0x4c] sm:$0xf]
    %v33 = vld [vmem:[%s0 + $0x50] sm:$0xf]
    %v34 = vld [vmem:[%s0 + $0x54] sm:$0xf]
    %v35 = vld [vmem:[%s0 + $0x58] sm:$0xf]
    %v36 = vld [vmem:[%s0 + $0x5c] sm:$0xf]
    %v37 = vld [vmem:[%s0 + $0x60] sm:$0xf]
    %v38 = vld [vmem:[%s0 + $0x64] sm:$0xf]
    %v39 = vld [vmem:[%s0 + $0x68] sm:$0xf]
    %v40 = vld [vmem:[%s0 + $0x6c] sm:$0xf]
    %v41 = vld [vmem:[%s0 + $0x70] sm:$0xf]
    %v42 = vld [vmem:[%s0 + $0x74] sm:$0xf]
    %v43 = vld [vmem:[%s0 + $0x78] sm:$0xf]
    %v44 = vld [vmem:[%s0 + $0x7c] sm:$0xf]
    %v45 = vld [vmem:[%s1] sm:$0x3]
    %v78 = vunpack.c.l.b16 %v13
    %v79 = vunpack.c.l.b16 %v14
    %v80 = vunpack.c.l.b16 %v15
    %v81 = vunpack.c.l.b16 %v16
    %v82 = vunpack.c.l.b16 %v17
    %v83 = vunpack.c.l.b16 %v18
    %v84 = vunpack.c.l.b16 %v19
    %v85 = vunpack.c.l.b16 %v20
    %v86 = vunpack.c.l.b16 %v21
    %v87 = vunpack.c.l.b16 %v22
    %v88 = vunpack.c.l.b16 %v23
    %v89 = vunpack.c.l.b16 %v24
    %v90 = vunpack.c.l.b16 %v25
    %v91 = vunpack.c.l.b16 %v26
    %v92 = vunpack.c.l.b16 %v27
    %v93 = vunpack.c.l.b16 %v28
    %v94 = vunpack.c.l.b16 %v29
    %v95 = vunpack.c.l.b16 %v30
    %v96 = vunpack.c.l.b16 %v31
    %v97 = vunpack.c.l.b16 %v32
    %v98 = vunpack.c.l.b16 %v33
    %v99 = vunpack.c.l.b16 %v34
    %v100 = vunpack.c.l.b16 %v35
    %v101 = vunpack.c.l.b16 %v36
    %v102 = vunpack.c.l.b16 %v37
    %v103 = vunpack.c.l.b16 %v38
    %v104 = vunpack.c.l.b16 %v39
    %v105 = vunpack.c.l.b16 %v40
    %v106 = vunpack.c.l.b16 %v41
    %v107 = vunpack.c.l.b16 %v42
    %v108 = vunpack.c.l.b16 %v43
    %v109 = vunpack.c.l.b16 %v44
    %v110 = vpack.c.b16 %v79, %v78
    %v111 = vpack.c.b16 %v81, %v80
    %v112 = vpack.c.b16 %v83, %v82
    %v113 = vpack.c.b16 %v85, %v84
    %v114 = vpack.c.b16 %v87, %v86
    %v115 = vpack.c.b16 %v89, %v88
    %v116 = vpack.c.b16 %v91, %v90
    %v117 = vpack.c.b16 %v93, %v92
    %v118 = vpack.c.b16 %v95, %v94
    %v119 = vpack.c.b16 %v97, %v96
    %v120 = vpack.c.b16 %v99, %v98
    %v121 = vpack.c.b16 %v101, %v100
    %v122 = vpack.c.b16 %v103, %v102
    %v123 = vpack.c.b16 %v105, %v104
    %v124 = vpack.c.b16 %v107, %v106
    %v125 = vpack.c.b16 %v109, %v108
    %vm126 = vcmask 31744
    %v128 = vsel %vm126, %v110, 0
    %v131 = vsel %vm126, %v111, 0
    %v134 = vsel %vm126, %v112, 0
    %v137 = vsel %vm126, %v113, 0
    %v140 = vsel %vm126, %v114, 0
    %v143 = vsel %vm126, %v115, 0
    %v146 = vsel %vm126, %v116, 0
    %v149 = vsel %vm126, %v117, 0
    %v152 = vsel %vm126, %v118, 0
    %v155 = vsel %vm126, %v119, 0
    %v158 = vsel %vm126, %v120, 0
    %v161 = vsel %vm126, %v121, 0
    %v164 = vsel %vm126, %v122, 0
    %v167 = vsel %vm126, %v123, 0
    %v170 = vsel %vm126, %v124, 0
    %v173 = vsel %vm126, %v125, 0
    %vm175 = vcmask 1041408
    %v177 = vsel %vm175, %v45, 0
    %179 = vmatprep.subr.bf16.mxu0 0
    %180 = vmatpush1.bf16.msra.mxu0 %v177
    %181 = vmatprep.subr.bf16.mxu0 0
    %182 = vmatpush1.bf16.msra.mxu0 0
    %183 = vmatprep.subr.bf16.mxu0 0
    %184 = vmatpush1.bf16.msra.mxu0 0
    %185 = vmatprep.subr.bf16.mxu0 0
    %186 = vmatpush1.bf16.msra.mxu0 0
    %187 = vmatprep.subr.bf16.mxu0 0
    %188 = vmatpush1.bf16.msra.mxu0 0
    %189 = vmatprep.subr.bf16.mxu0 0
    %190 = vmatpush1.bf16.msra.mxu0 0
    %191 = vmatprep.subr.bf16.mxu0 0
    %192 = vmatpush1.bf16.msra.mxu0 0
    %193 = vmatprep.subr.bf16.mxu0 0
    %194 = vmatpush1.bf16.msra.mxu0 0
    %195 = vmatprep.subr.bf16.mxu0 0
    %196 = vmatpush1.bf16.msra.mxu0 0
    %197 = vmatprep.subr.bf16.mxu0 0
    %198 = vmatpush1.bf16.msra.mxu0 0
    %199 = vmatprep.subr.bf16.mxu0 0
    %200 = vmatpush1.bf16.msra.mxu0 0
    %201 = vmatprep.subr.bf16.mxu0 0
    %202 = vmatpush1.bf16.msra.mxu0 0
    %203 = vmatprep.subr.bf16.mxu0 0
    %204 = vmatpush1.bf16.msra.mxu0 0
    %205 = vmatprep.subr.bf16.mxu0 0
    %206 = vmatpush1.bf16.msra.mxu0 0
    %207 = vmatprep.subr.bf16.mxu0 0
    %208 = vmatpush1.bf16.msra.mxu0 0
    %209 = vmatprep.subr.bf16.mxu0 0
    %210 = vmatpush1.bf16.msra.mxu0 0
    %211 = vmatprep.mubr.bf16.mxu0 0
    %212 = vmatmul.mubr.bf16.gmra.mrb[0].mxu0 %v128
    %v213 = vpop.f32.mrb[0].mxu0
    %v214 = vadd.f32 0.0, %v213
    %v215 = vpop.f32.mrb[0].mxu0
    %v216 = vpop.f32.mrb[0].mxu0
    %v217 = vadd.f32 0.0, %v216
    %v218 = vpop.f32.mrb[0].mxu0
    %219 = vmatprep.mubr.bf16.mxu0 0
    %220 = vmatmul.mubr.bf16.gmra.mrb[0].mxu0 %v131
    %v221 = vpop.f32.mrb[0].mxu0
    %v222 = vadd.f32 0.0, %v221
    %v223 = vpop.f32.mrb[0].mxu0
    %v224 = vpop.f32.mrb[0].mxu0
    %v225 = vadd.f32 0.0, %v224
    %v226 = vpop.f32.mrb[0].mxu0
    %227 = vmatprep.mubr.bf16.mxu0 0
    %228 = vmatmul.mubr.bf16.gmra.mrb[0].mxu0 %v134
    %v229 = vpop.f32.mrb[0].mxu0
    %v230 = vadd.f32 0.0, %v229
    %v231 = vpop.f32.mrb[0].mxu0
    %v232 = vpop.f32.mrb[0].mxu0
    %v233 = vadd.f32 0.0, %v232
    %v234 = vpop.f32.mrb[0].mxu0
    %235 = vmatprep.mubr.bf16.mxu0 0
    %236 = vmatmul.mubr.bf16.gmra.mrb[0].mxu0 %v137
    %v237 = vpop.f32.mrb[0].mxu0
    %v238 = vadd.f32 0.0, %v237
    %v239 = vpop.f32.mrb[0].mxu0
    %v240 = vpop.f32.mrb[0].mxu0
    %v241 = vadd.f32 0.0, %v240
    %v242 = vpop.f32.mrb[0].mxu0
    %243 = vmatprep.mubr.bf16.mxu0 0
    %244 = vmatmul.mubr.bf16.gmra.mrb[0].mxu0 %v140
    %v245 = vpop.f32.mrb[0].mxu0
    %v246 = vadd.f32 0.0, %v245
    %v247 = vpop.f32.mrb[0].mxu0
    %v248 = vpop.f32.mrb[0].mxu0
    %v249 = vadd.f32 0.0, %v248
    %v250 = vpop.f32.mrb[0].mxu0
    %251 = vmatprep.mubr.bf16.mxu0 0
    %252 = vmatmul.mubr.bf16.gmra.mrb[0].mxu0 %v143
    %v253 = vpop.f32.mrb[0].mxu0
    %v254 = vadd.f32 0.0, %v253
    %v255 = vpop.f32.mrb[0].mxu0
    %v256 = vpop.f32.mrb[0].mxu0
    %v257 = vadd.f32 0.0, %v256
    %v258 = vpop.f32.mrb[0].mxu0
    %259 = vmatprep.mubr.bf16.mxu0 0
    %260 = vmatmul.mubr.bf16.gmra.mrb[0].mxu0 %v146
    %v261 = vpop.f32.mrb[0].mxu0
    %v262 = vadd.f32 0.0, %v261
    %v263 = vpop.f32.mrb[0].mxu0
    %v264 = vpop.f32.mrb[0].mxu0
    %v265 = vadd.f32 0.0, %v264
    %v266 = vpop.f32.mrb[0].mxu0
    %267 = vmatprep.mubr.bf16.mxu0 0
    %268 = vmatmul.mubr.bf16.gmra.mrb[0].mxu0 %v149
    %v269 = vpop.f32.mrb[0].mxu0
    %v270 = vadd.f32 0.0, %v269
    %v271 = vpop.f32.mrb[0].mxu0
    %v272 = vpop.f32.mrb[0].mxu0
    %v273 = vadd.f32 0.0, %v272
    %v274 = vpop.f32.mrb[0].mxu0
    %275 = vmatprep.mubr.bf16.mxu0 0
    %276 = vmatmul.mubr.bf16.gmra.mrb[0].mxu0 %v152
    %v277 = vpop.f32.mrb[0].mxu0
    %v278 = vadd.f32 0.0, %v277
    %v279 = vpop.f32.mrb[0].mxu0
    %v280 = vpop.f32.mrb[0].mxu0
    %v281 = vadd.f32 0.0, %v280
    %v282 = vpop.f32.mrb[0].mxu0
    %283 = vmatprep.mubr.bf16.mxu0 0
    %284 = vmatmul.mubr.bf16.gmra.mrb[0].mxu0 %v155
    %v285 = vpop.f32.mrb[0].mxu0
    %v286 = vadd.f32 0.0, %v285
    %v287 = vpop.f32.mrb[0].mxu0
    %v288 = vpop.f32.mrb[0].mxu0
    %v289 = vadd.f32 0.0, %v288
    %v290 = vpop.f32.mrb[0].mxu0
    %291 = vmatprep.mubr.bf16.mxu0 0
    %292 = vmatmul.mubr.bf16.gmra.mrb[0].mxu0 %v158
    %v293 = vpop.f32.mrb[0].mxu0
    %v294 = vadd.f32 0.0, %v293
    %v295 = vpop.f32.mrb[0].mxu0
    %v296 = vpop.f32.mrb[0].mxu0
    %v297 = vadd.f32 0.0, %v296
    %v298 = vpop.f32.mrb[0].mxu0
    %299 = vmatprep.mubr.bf16.mxu0 0
    %300 = vmatmul.mubr.bf16.gmra.mrb[0].mxu0 %v161
    %v301 = vpop.f32.mrb[0].mxu0
    %v302 = vadd.f32 0.0, %v301
    %v303 = vpop.f32.mrb[0].mxu0
    %v304 = vpop.f32.mrb[0].mxu0
    %v305 = vadd.f32 0.0, %v304
    %v306 = vpop.f32.mrb[0].mxu0
    %307 = vmatprep.mubr.bf16.mxu0 0
    %308 = vmatmul.mubr.bf16.gmra.mrb[0].mxu0 %v164
    %v309 = vpop.f32.mrb[0].mxu0
    %v310 = vadd.f32 0.0, %v309
    %v311 = vpop.f32.mrb[0].mxu0
    %v312 = vpop.f32.mrb[0].mxu0
    %v313 = vadd.f32 0.0, %v312
    %v314 = vpop.f32.mrb[0].mxu0
    %315 = vmatprep.mubr.bf16.mxu0 0
    %316 = vmatmul.mubr.bf16.gmra.mrb[0].mxu0 %v167
    %v317 = vpop.f32.mrb[0].mxu0
    %v318 = vadd.f32 0.0, %v317
    %v319 = vpop.f32.mrb[0].mxu0
    %v320 = vpop.f32.mrb[0].mxu0
    %v321 = vadd.f32 0.0, %v320
    %v322 = vpop.f32.mrb[0].mxu0
    %323 = vmatprep.mubr.bf16.mxu0 0
    %324 = vmatmul.mubr.bf16.gmra.mrb[0].mxu0 %v170
    %v325 = vpop.f32.mrb[0].mxu0
    %v326 = vadd.f32 0.0, %v325
    %v327 = vpop.f32.mrb[0].mxu0
    %v328 = vpop.f32.mrb[0].mxu0
    %v329 = vadd.f32 0.0, %v328
    %v330 = vpop.f32.mrb[0].mxu0
    %331 = vmatprep.mubr.bf16.mxu0 0
    %332 = vmatmul.mubr.bf16.gmra.mrb[0].mxu0 %v173
    %v333 = vpop.f32.mrb[0].mxu0
    %v334 = vadd.f32 0.0, %v333
    %v335 = vpop.f32.mrb[0].mxu0
    %v336 = vpop.f32.mrb[0].mxu0
    %v337 = vadd.f32 0.0, %v336
    %v338 = vpop.f32.mrb[0].mxu0
    %339 = vdwg.mxu0
    %v340 = vmax.f32 %v214, 0.0
    %v341 = vmax.f32 %v217, 0.0
    %v342 = vmax.f32 %v222, 0.0
    %v343 = vmax.f32 %v225, 0.0
    %v344 = vmax.f32 %v230, 0.0
    %v345 = vmax.f32 %v233, 0.0
    %v346 = vmax.f32 %v238, 0.0
    %v347 = vmax.f32 %v241, 0.0
    %v348 = vmax.f32 %v246, 0.0
    %v349 = vmax.f32 %v249, 0.0
    %v350 = vmax.f32 %v254, 0.0
    %v351 = vmax.f32 %v257, 0.0
    %v352 = vmax.f32 %v262, 0.0
    %v353 = vmax.f32 %v265, 0.0
    %v354 = vmax.f32 %v270, 0.0
    %v355 = vmax.f32 %v273, 0.0
    %v356 = vmax.f32 %v278, 0.0
    %v357 = vmax.f32 %v281, 0.0
    %v358 = vmax.f32 %v286, 0.0
    %v359 = vmax.f32 %v289, 0.0
    %v360 = vmax.f32 %v294, 0.0
    %v361 = vmax.f32 %v297, 0.0
    %v362 = vmax.f32 %v302, 0.0
    %v363 = vmax.f32 %v305, 0.0
    %v364 = vmax.f32 %v310, 0.0
    %v365 = vmax.f32 %v313, 0.0
    %v366 = vmax.f32 %v318, 0.0
    %v367 = vmax.f32 %v321, 0.0
    %v368 = vmax.f32 %v326, 0.0
    %v369 = vmax.f32 %v329, 0.0
    %v370 = vmax.f32 %v334, 0.0
    %v371 = vmax.f32 %v337, 0.0
    %v372 = vpack.c.bf16 %v341, %v340
    %v373 = vpack.c.bf16 %v343, %v342
    %v374 = vpack.c.bf16 %v345, %v344
    %v375 = vpack.c.bf16 %v347, %v346
    %v376 = vpack.c.bf16 %v349, %v348
    %v377 = vpack.c.bf16 %v351, %v350
    %v378 = vpack.c.bf16 %v353, %v352
    %v379 = vpack.c.bf16 %v355, %v354
    %v380 = vpack.c.bf16 %v357, %v356
    %v381 = vpack.c.bf16 %v359, %v358
    %v382 = vpack.c.bf16 %v361, %v360
    %v383 = vpack.c.bf16 %v363, %v362
    %v384 = vpack.c.bf16 %v365, %v364
    %v385 = vpack.c.bf16 %v367, %v366
    %v386 = vpack.c.bf16 %v369, %v368
    %v387 = vpack.c.bf16 %v371, %v370
    %v404 = vunpack.c.l.b16 %v372
    %v405 = vunpack.c.h.b16 %v372
    %v406 = vunpack.c.l.b16 %v373
    %v407 = vunpack.c.h.b16 %v373
    %v408 = vunpack.c.l.b16 %v374
    %v409 = vunpack.c.h.b16 %v374
    %v410 = vunpack.c.l.b16 %v375
    %v411 = vunpack.c.h.b16 %v375
    %v412 = vunpack.c.l.b16 %v376
    %v413 = vunpack.c.h.b16 %v376
    %v414 = vunpack.c.l.b16 %v377
    %v415 = vunpack.c.h.b16 %v377
    %v416 = vunpack.c.l.b16 %v378
    %v417 = vunpack.c.h.b16 %v378
    %v418 = vunpack.c.l.b16 %v379
    %v419 = vunpack.c.h.b16 %v379
    %v420 = vunpack.c.l.b16 %v380
    %v421 = vunpack.c.h.b16 %v380
    %v422 = vunpack.c.l.b16 %v381
    %v423 = vunpack.c.h.b16 %v381
    %v424 = vunpack.c.l.b16 %v382
    %v425 = vunpack.c.h.b16 %v382
    %v426 = vunpack.c.l.b16 %v383
    %v427 = vunpack.c.h.b16 %v383
    %v428 = vunpack.c.l.b16 %v384
    %v429 = vunpack.c.h.b16 %v384
    %v430 = vunpack.c.l.b16 %v385
    %v431 = vunpack.c.h.b16 %v385
    %v432 = vunpack.c.l.b16 %v386
    %v433 = vunpack.c.h.b16 %v386
    %v434 = vunpack.c.l.b16 %v387
    %v435 = vunpack.c.h.b16 %v387
    %v436 = vpack.c.b16 %v404, %v404
    %v437 = vpack.c.b16 %v405, %v405
    %v438 = vpack.c.b16 %v406, %v406
    %v439 = vpack.c.b16 %v407, %v407
    %v440 = vpack.c.b16 %v408, %v408
    %v441 = vpack.c.b16 %v409, %v409
    %v442 = vpack.c.b16 %v410, %v410
    %v443 = vpack.c.b16 %v411, %v411
    %v444 = vpack.c.b16 %v412, %v412
    %v445 = vpack.c.b16 %v413, %v413
    %v446 = vpack.c.b16 %v414, %v414
    %v447 = vpack.c.b16 %v415, %v415
    %v448 = vpack.c.b16 %v416, %v416
    %v449 = vpack.c.b16 %v417, %v417
    %v450 = vpack.c.b16 %v418, %v418
    %v451 = vpack.c.b16 %v419, %v419
    %v452 = vpack.c.b16 %v420, %v420
    %v453 = vpack.c.b16 %v421, %v421
    %v454 = vpack.c.b16 %v422, %v422
    %v455 = vpack.c.b16 %v423, %v423
    %v456 = vpack.c.b16 %v424, %v424
    %v457 = vpack.c.b16 %v425, %v425
    %v458 = vpack.c.b16 %v426, %v426
    %v459 = vpack.c.b16 %v427, %v427
    %v460 = vpack.c.b16 %v428, %v428
    %v461 = vpack.c.b16 %v429, %v429
    %v462 = vpack.c.b16 %v430, %v430
    %v463 = vpack.c.b16 %v431, %v431
    %v464 = vpack.c.b16 %v432, %v432
    %v465 = vpack.c.b16 %v433, %v433
    %v466 = vpack.c.b16 %v434, %v434
    %v467 = vpack.c.b16 %v435, %v435
    %500 = vst [vmem:[#allocation2] sm:$0xf] %v436
    %501 = vst [vmem:[#allocation2 + $0x4] sm:$0xf] %v437
    %502 = vst [vmem:[#allocation2 + $0x8] sm:$0xf] %v438
    %503 = vst [vmem:[#allocation2 + $0xc] sm:$0xf] %v439
    %504 = vst [vmem:[#allocation2 + $0x10] sm:$0xf] %v440
    %505 = vst [vmem:[#allocation2 + $0x14] sm:$0xf] %v441
    %506 = vst [vmem:[#allocation2 + $0x18] sm:$0xf] %v442
    %507 = vst [vmem:[#allocation2 + $0x1c] sm:$0xf] %v443
    %508 = vst [vmem:[#allocation2 + $0x20] sm:$0xf] %v444
    %509 = vst [vmem:[#allocation2 + $0x24] sm:$0xf] %v445
    %510 = vst [vmem:[#allocation2 + $0x28] sm:$0xf] %v446
    %511 = vst [vmem:[#allocation2 + $0x2c] sm:$0xf] %v447
    %512 = vst [vmem:[#allocation2 + $0x30] sm:$0xf] %v448
    %513 = vst [vmem:[#allocation2 + $0x34] sm:$0xf] %v449
    %514 = vst [vmem:[#allocation2 + $0x38] sm:$0xf] %v450
    %515 = vst [vmem:[#allocation2 + $0x3c] sm:$0xf] %v451
    %516 = vst [vmem:[#allocation2 + $0x40] sm:$0xf] %v452
    %517 = vst [vmem:[#allocation2 + $0x44] sm:$0xf] %v453
    %518 = vst [vmem:[#allocation2 + $0x48] sm:$0xf] %v454
    %519 = vst [vmem:[#allocation2 + $0x4c] sm:$0xf] %v455
    %520 = vst [vmem:[#allocation2 + $0x50] sm:$0xf] %v456
    %521 = vst [vmem:[#allocation2 + $0x54] sm:$0xf] %v457
    %522 = vst [vmem:[#allocation2 + $0x58] sm:$0xf] %v458
    %523 = vst [vmem:[#allocation2 + $0x5c] sm:$0xf] %v459
    %524 = vst [vmem:[#allocation2 + $0x60] sm:$0xf] %v460
    %525 = vst [vmem:[#allocation2 + $0x64] sm:$0xf] %v461
    %526 = vst [vmem:[#allocation2 + $0x68] sm:$0xf] %v462
    %527 = vst [vmem:[#allocation2 + $0x6c] sm:$0xf] %v463
    %528 = vst [vmem:[#allocation2 + $0x70] sm:$0xf] %v464
    %529 = vst [vmem:[#allocation2 + $0x74] sm:$0xf] %v465
    %530 = vst [vmem:[#allocation2 + $0x78] sm:$0xf] %v466
    %531 = vst [vmem:[#allocation2 + $0x7c] sm:$0xf] %v467
    // Predicated region
    $region10: #{tpu_custom_call.1} parent=1 // pred_check
      _
    $region11: #{tpu_custom_call.1} parent=1 // pred_check_branch
      %533 = sbr.rel (0) target = $region13
    $region12: #{tpu_custom_call.1} parent=1 // pred_region
      %s535 = ssub.s32 2048, 2048
      %536 = vsyncadd [#allocation3], %s535
      %s537 = sshll.u32 [#allocation2], 4
      %s538 = int_to_ptr.vmem [resolvable:$true] %s537
      %543 = dma.vmem_to_hbm [thread:$0]  %s538, 2048, %s2, [#allocation3], 64, 64, 4
    $region13: #{tpu_custom_call.1} parent=1 // pred_fallthru
      _
    // Predicated region
    $region14: #{tpu_custom_call.1} parent=1 // pred_check
      _
    $region15: #{tpu_custom_call.1} parent=1 // pred_check_branch
      %545 = sbr.rel (0) target = $region17
    $region16: #{tpu_custom_call.1} parent=1 // pred_region
      %546 = dma.done [#allocation3], 2048
    $region17: #{tpu_custom_call.1} parent=1 // pred_fallthru
      _
    %547 = vsyncpa [#allocation3], 1

</llo_original>
